<compile_context>
chip_gen: v6e
topology: v6e:2x2x1
jax: 0.10.0
libtpu: 0.0.40
codegen_flags: <defaults>
</compile_context>

<pallas_src>
import jax
import jax.numpy as jnp
from jax.experimental import pallas as pl
from jax.experimental.pallas import tpu as pltpu

_NEG_PAD = -1e30  # logit value for padded data lanes -> exp() == 0 in softmax


def _round_up(n, m):
  return ((n + m - 1) // m) * m


def _simplex_mlp_kernel(x_ref, w1_ref, b1_ref, w2_ref, b2_ref, w3_ref, b3_ref,
                        skip_ref, o_ref):
  """One batch tile of: softmax(MLP2(x) + skip * x, axis=-1)."""
  x = x_ref[...]                                   # (bt, Dp) float32
  xb = x.astype(jnp.bfloat16)

  # Linear 1 + ReLU (dropout == identity at inference).  bf16 MXU, f32 acc.
  h1 = jnp.dot(xb, w1_ref[...], preferred_element_type=jnp.float32) + b1_ref[...]
  h1 = jnp.maximum(h1, 0.0)

  # Linear 2 + ReLU.
  h2 = jnp.dot(h1.astype(jnp.bfloat16), w2_ref[...],
               preferred_element_type=jnp.float32) + b2_ref[...]
  h2 = jnp.maximum(h2, 0.0)

  # Linear 3 back to data lanes; padded output lanes carry b3 == -1e30.
  y = jnp.dot(h2.astype(jnp.bfloat16), w3_ref[...],
              preferred_element_type=jnp.float32) + b3_ref[...]

  # Simplex wrapper: scalar skip (SMEM read) + numerically-stable softmax.
  logits = y + skip_ref[0] * x
  m = jnp.max(logits, axis=-1, keepdims=True)
  e = jnp.exp(logits - m)
  s = jnp.sum(e, axis=-1, keepdims=True)
  # Exact divide so rows land exactly on the probability simplex.
  o_ref[...] = (e / s).astype(o_ref.dtype)


def _vmem_ceiling():
  """Generation-aware VMEM request ceiling (bytes)."""
  try:
    cap = pltpu.get_tpu_info().vmem_capacity_bytes
  except Exception:
    cap = 64 << 20  # conservative (v7x-sized) fallback
  # Leave ~20% headroom for compiler scratch / semaphores; never ask > 100 MiB.
  return min(int(cap * 0.8), 100 << 20)


def simplex_shallow_mlp2(x, params, *, batch_tile=256):
  """x: (B, data_dim) float32.  params: dict of weights (PyTorch (out,in) layout)."""
  B, D = x.shape
  H = params["w1"].shape[0]

  # --- lane padding: make data/hidden dims multiples of 128 lanes -----------
  Dp = _round_up(D, 128)
  Hp = _round_up(H, 128)

  # --- VMEM budget -----------------------------------------------------------
  weight_bytes = 2 * (Dp * Hp + Hp * Hp + Hp * Dp)        # bf16, single-buffered
  bias_bytes = 4 * (2 * Hp + Dp)                          # f32, single-buffered
  fixed_bytes = weight_bytes + bias_bytes

  def _tile_bytes(bt):
    io = 2 * 2 * 4 * bt * Dp                              # double-buffered x/out
    act = 4 * bt * (2 * Hp + 2 * Dp) + 2 * bt * (Hp + Dp)  # f32 temps + bf16 casts
    return io + act

  ceiling = _vmem_ceiling()
  headroom = 4 << 20

  # --- batch tiling ----------------------------------------------------------
  bt = max(8, min(_round_up(batch_tile, 8), _round_up(B, 8)))
  # Grow toward 512 rows while the VMEM budget and the batch size permit.
  while (bt * 2 <= 512 and _round_up(B, 8) >= bt * 2
         and fixed_bytes + _tile_bytes(bt * 2) + headroom <= ceiling):
    bt *= 2
  # Shrink if even the requested tile does not fit.
  while bt > 8 and fixed_bytes + _tile_bytes(bt) + headroom > ceiling:
    bt = _round_up(bt // 2, 8)
  # Keep >= 2 grid tiles so v7x's second TensorCore has work to shard.
  if _round_up(B, bt) // bt < 2 and bt >= 16:
    bt = _round_up(bt // 2, 8)
  B_pad = _round_up(B, bt)

  # --- glue: pad + transpose weights to (in, out), biases to (1, out) --------
  def _pad2(a, rows, cols):
    return jnp.pad(a, ((0, rows - a.shape[0]), (0, cols - a.shape[1])))

  x_in = jnp.pad(x.astype(jnp.float32), ((0, B_pad - B), (0, Dp - D)))
  w1 = _pad2(params["w1"].T, Dp, Hp).astype(jnp.bfloat16)          # (Dp, Hp)
  b1 = jnp.pad(params["b1"].astype(jnp.float32), (0, Hp - H)).reshape(1, Hp)
  w2 = _pad2(params["w2"].T, Hp, Hp).astype(jnp.bfloat16)          # (Hp, Hp)
  b2 = jnp.pad(params["b2"].astype(jnp.float32), (0, Hp - H)).reshape(1, Hp)
  w3 = _pad2(params["w3"].T, Hp, Dp).astype(jnp.bfloat16)          # (Hp, Dp)
  # Padded data lanes get a huge negative bias so softmax ignores them.
  b3 = jnp.pad(params["b3"].astype(jnp.float32), (0, Dp - D),
               constant_values=_NEG_PAD).reshape(1, Dp)
  skip = jnp.asarray(params["skip"], jnp.float32).reshape(1)       # SMEM scalar

  grid = (B_pad // bt,)
  tile_map = lambda i: (i, 0)
  full_map = lambda i: (0, 0)   # weights / biases: same (whole) block each step
  resident = pl.Buffered(1)     # constant index map -> no double buffering

  vmem_limit = int(min(max(fixed_bytes + _tile_bytes(bt) + headroom, 32 << 20),
                       ceiling))

  cost = pl.CostEstimate(
      flops=2 * B_pad * (Dp * Hp + Hp * Hp + Hp * Dp),
      transcendentals=B_pad * Dp,                       # softmax exp
      bytes_accessed=fixed_bytes + 4 * 2 * B_pad * Dp)

  out = pl.pallas_call(
      _simplex_mlp_kernel,
      out_shape=jax.ShapeDtypeStruct((B_pad, Dp), jnp.float32),
      grid_spec=pltpu.PrefetchScalarGridSpec(
          num_scalar_prefetch=0,
          grid=grid,
          in_specs=[
              pl.BlockSpec((bt, Dp), tile_map),                          # x tile
              pl.BlockSpec((Dp, Hp), full_map, pipeline_mode=resident),  # w1
              pl.BlockSpec((1, Hp), full_map, pipeline_mode=resident),   # b1
              pl.BlockSpec((Hp, Hp), full_map, pipeline_mode=resident),  # w2
              pl.BlockSpec((1, Hp), full_map, pipeline_mode=resident),   # b2
              pl.BlockSpec((Hp, Dp), full_map, pipeline_mode=resident),  # w3
              pl.BlockSpec((1, Dp), full_map, pipeline_mode=resident),   # b3
              pl.BlockSpec(memory_space=pltpu.MemorySpace.SMEM),         # skip
          ],
          out_specs=pl.BlockSpec((bt, Dp), tile_map),
      ),
      compiler_params=pltpu.CompilerParams(
          dimension_semantics=("parallel",),
          vmem_limit_bytes=vmem_limit),
      cost_estimate=cost,
  )(x_in, w1, b1, w2, b2, w3, b3, skip)

  return out[:B, :D]


def init_params(key, data_dim, hidden_dim, learnable_skip=True):
  """Deterministic synthetic init (PyTorch nn.Linear layout: weight = (out, in))."""
  k1, k2, k3, k4, k5, k6 = jax.random.split(key, 6)
  def lin(kw, kb, fan_out, fan_in):
    bound = 1.0 / jnp.sqrt(fan_in)
    w = jax.random.uniform(kw, (fan_out, fan_in), jnp.float32, -bound, bound)
    b = jax.random.uniform(kb, (fan_out,), jnp.float32, -bound, bound)
    return w, b
  w1, b1 = lin(k1, k2, hidden_dim, data_dim)
  w2, b2 = lin(k3, k4, hidden_dim, hidden_dim)
  w3, b3 = lin(k5, k6, data_dim, hidden_dim)
  # learnable skip is a scalar parameter initialized to 1.0 (fixed 1.0 otherwise).
  skip = jnp.ones((), jnp.float32)
  return dict(w1=w1, b1=b1, w2=w2, b2=b2, w3=w3, b3=b3, skip=skip)


def _reference(x, p):
  h1 = jnp.maximum(x @ p["w1"].T + p["b1"], 0.0)
  h2 = jnp.maximum(h1 @ p["w2"].T + p["b2"], 0.0)
  y = h2 @ p["w3"].T + p["b3"]
  return jax.nn.softmax(y + p["skip"] * x, axis=-1)


if __name__ == "__main__":
  key = jax.random.PRNGKey(0)
  kx, kp = jax.random.split(key)

  # Ragged batch (20 is not a multiple of 8) exercises batch and lane padding.
  batch, data_dim, hidden_dim = 20, 16, 32
  x = jax.random.normal(kx, (batch, data_dim), jnp.float32)
  params = init_params(kp, data_dim, hidden_dim, learnable_skip=True)

  out = jax.block_until_ready(simplex_shallow_mlp2(x, params))

  ref = _reference(x, params)
  assert out.shape == (batch, data_dim)
  # bf16 matmuls vs f32 reference -> compare at 2e-2.
  assert jnp.allclose(out, ref, atol=2e-2, rtol=2e-2), "mismatch vs reference"
  # Exact softmax divide -> rows lie on the probability simplex.
  assert jnp.allclose(jnp.sum(out, axis=-1), 1.0, atol=1e-3)

  print("KERNEL_OK")
</pallas_src>

<mosaic_0001>
module attributes {stable_mosaic.version = 11 : i64} {
  func.func @_simplex_mlp_kernel(%arg0: i32, %arg1: memref<16x128xf32, #tpu.memory_space<vmem>>, %arg2: memref<128x128xbf16, #tpu.memory_space<vmem>>, %arg3: memref<1x128xf32, #tpu.memory_space<vmem>>, %arg4: memref<128x128xbf16, #tpu.memory_space<vmem>>, %arg5: memref<1x128xf32, #tpu.memory_space<vmem>>, %arg6: memref<128x128xbf16, #tpu.memory_space<vmem>>, %arg7: memref<1x128xf32, #tpu.memory_space<vmem>>, %arg8: memref<1xf32, #tpu.memory_space<smem>>, %arg9: memref<16x128xf32, #tpu.memory_space<vmem>>) attributes {dimension_semantics = [#tpu.dimension_semantics<parallel>], iteration_bounds = array<i64: 2>, scalar_prefetch = 0 : i64, scratch_operands = 0 : i64, tpu.core_type = #tpu.core_type<tc>, window_params = [{transform_indices = @transform_0, window_bounds = array<i64: 16, 128>}, {pipeline_mode = #tpu.pipeline_mode<synchronous>, transform_indices = @transform_1, window_bounds = array<i64: 128, 128>}, {pipeline_mode = #tpu.pipeline_mode<synchronous>, transform_indices = @transform_2, window_bounds = array<i64: 1, 128>}, {pipeline_mode = #tpu.pipeline_mode<synchronous>, transform_indices = @transform_3, window_bounds = array<i64: 128, 128>}, {pipeline_mode = #tpu.pipeline_mode<synchronous>, transform_indices = @transform_4, window_bounds = array<i64: 1, 128>}, {pipeline_mode = #tpu.pipeline_mode<synchronous>, transform_indices = @transform_5, window_bounds = array<i64: 128, 128>}, {pipeline_mode = #tpu.pipeline_mode<synchronous>, transform_indices = @transform_6, window_bounds = array<i64: 1, 128>}, {transform_indices = @transform_7, window_bounds = array<i64: 1>}, {transform_indices = @transform_8, window_bounds = array<i64: 16, 128>}]} {
    %c0 = arith.constant 0 : index
    %c0_0 = arith.constant 0 : index
    %0 = vector.load %arg1[%c0, %c0_0] : memref<16x128xf32, #tpu.memory_space<vmem>>, vector<16x128xf32>
    %1 = arith.truncf %0 : vector<16x128xf32> to vector<16x128xbf16>
    %c0_1 = arith.constant 0 : index
    %c0_2 = arith.constant 0 : index
    %2 = vector.load %arg2[%c0_1, %c0_2] : memref<128x128xbf16, #tpu.memory_space<vmem>>, vector<128x128xbf16>
    %cst = arith.constant dense<0.000000e+00> : vector<16x128xf32>
    %3 = tpu.matmul %1, %2, %cst {dimension_numbers = #tpu.dot_dimension_numbers<[1], [0], [0], [1], [0, 0, 1, 1], [], []>} : vector<16x128xbf16>, vector<128x128xbf16>, vector<16x128xf32> -> vector<16x128xf32>
    %c0_3 = arith.constant 0 : index
    %c0_4 = arith.constant 0 : index
    %4 = vector.load %arg3[%c0_3, %c0_4] : memref<1x128xf32, #tpu.memory_space<vmem>>, vector<1x128xf32>
    %5 = vector.broadcast %4 : vector<1x128xf32> to vector<16x128xf32>
    %6 = arith.addf %3, %5 : vector<16x128xf32>
    %cst_5 = arith.constant 0.000000e+00 : f32
    %7 = vector.broadcast %cst_5 : f32 to vector<16x128xf32>
    %8 = arith.maximumf %6, %7 : vector<16x128xf32>
    %9 = arith.truncf %8 : vector<16x128xf32> to vector<16x128xbf16>
    %c0_6 = arith.constant 0 : index
    %c0_7 = arith.constant 0 : index
    %10 = vector.load %arg4[%c0_6, %c0_7] : memref<128x128xbf16, #tpu.memory_space<vmem>>, vector<128x128xbf16>
    %cst_8 = arith.constant dense<0.000000e+00> : vector<16x128xf32>
    %11 = tpu.matmul %9, %10, %cst_8 {dimension_numbers = #tpu.dot_dimension_numbers<[1], [0], [0], [1], [0, 0, 1, 1], [], []>} : vector<16x128xbf16>, vector<128x128xbf16>, vector<16x128xf32> -> vector<16x128xf32>
    %c0_9 = arith.constant 0 : index
    %c0_10 = arith.constant 0 : index
    %12 = vector.load %arg5[%c0_9, %c0_10] : memref<1x128xf32, #tpu.memory_space<vmem>>, vector<1x128xf32>
    %13 = vector.broadcast %12 : vector<1x128xf32> to vector<16x128xf32>
    %14 = arith.addf %11, %13 : vector<16x128xf32>
    %cst_11 = arith.constant 0.000000e+00 : f32
    %15 = vector.broadcast %cst_11 : f32 to vector<16x128xf32>
    %16 = arith.maximumf %14, %15 : vector<16x128xf32>
    %17 = arith.truncf %16 : vector<16x128xf32> to vector<16x128xbf16>
    %c0_12 = arith.constant 0 : index
    %c0_13 = arith.constant 0 : index
    %18 = vector.load %arg6[%c0_12, %c0_13] : memref<128x128xbf16, #tpu.memory_space<vmem>>, vector<128x128xbf16>
    %cst_14 = arith.constant dense<0.000000e+00> : vector<16x128xf32>
    %19 = tpu.matmul %17, %18, %cst_14 {dimension_numbers = #tpu.dot_dimension_numbers<[1], [0], [0], [1], [0, 0, 1, 1], [], []>} : vector<16x128xbf16>, vector<128x128xbf16>, vector<16x128xf32> -> vector<16x128xf32>
    %c0_15 = arith.constant 0 : index
    %c0_16 = arith.constant 0 : index
    %20 = vector.load %arg7[%c0_15, %c0_16] : memref<1x128xf32, #tpu.memory_space<vmem>>, vector<1x128xf32>
    %21 = vector.broadcast %20 : vector<1x128xf32> to vector<16x128xf32>
    %22 = arith.addf %19, %21 : vector<16x128xf32>
    %c0_17 = arith.constant 0 : index
    %23 = memref.load %arg8[%c0_17] : memref<1xf32, #tpu.memory_space<smem>>
    %24 = vector.broadcast %23 : f32 to vector<16x128xf32>
    %25 = arith.mulf %24, %0 : vector<16x128xf32>
    %26 = arith.addf %22, %25 : vector<16x128xf32>
    %cst_18 = arith.constant dense<0xFF800000> : vector<16xf32>
    %27 = vector.multi_reduction <maximumf>, %26, %cst_18 [1] : vector<16x128xf32> to vector<16xf32>
    %28 = vector.shape_cast %27 : vector<16xf32> to vector<16x1xf32>
    %29 = vector.broadcast %28 : vector<16x1xf32> to vector<16x128xf32>
    %30 = arith.subf %26, %29 : vector<16x128xf32>
    %31 = math.exp %30 : vector<16x128xf32>
    %cst_19 = arith.constant dense<0.000000e+00> : vector<16xf32>
    %32 = vector.multi_reduction <add>, %31, %cst_19 [1] : vector<16x128xf32> to vector<16xf32>
    %33 = vector.shape_cast %32 : vector<16xf32> to vector<16x1xf32>
    %34 = vector.broadcast %33 : vector<16x1xf32> to vector<16x128xf32>
    %35 = arith.divf %31, %34 : vector<16x128xf32>
    %c0_20 = arith.constant 0 : index
    %c0_21 = arith.constant 0 : index
    %36 = vector.load %arg9[%c0_20, %c0_21] : memref<16x128xf32, #tpu.memory_space<vmem>>, vector<16x128xf32>
    tpu.vector_store %arg9[%c0_20, %c0_21], %35 {strides = array<i32>} : memref<16x128xf32, #tpu.memory_space<vmem>>, vector<16x128xf32>,
    return
  }
  func.func @transform_0(%arg0: i32) -> (i32, i32) {
    %c0_i32 = arith.constant 0 : i32
    %c0_i32_0 = arith.constant 0 : i32
    return %arg0, %c0_i32 : i32, i32
  }
  func.func @transform_1(%arg0: i32) -> (i32, i32) {
    %c0_i32 = arith.constant 0 : i32
    %c0_i32_0 = arith.constant 0 : i32
    %c0_i32_1 = arith.constant 0 : i32
    return %c0_i32, %c0_i32_0 : i32, i32
  }
  func.func @transform_2(%arg0: i32) -> (i32, i32) {
    %c0_i32 = arith.constant 0 : i32
    %c0_i32_0 = arith.constant 0 : i32
    %c0_i32_1 = arith.constant 0 : i32
    return %c0_i32, %c0_i32_0 : i32, i32
  }
  func.func @transform_3(%arg0: i32) -> (i32, i32) {
    %c0_i32 = arith.constant 0 : i32
    %c0_i32_0 = arith.constant 0 : i32
    %c0_i32_1 = arith.constant 0 : i32
    return %c0_i32, %c0_i32_0 : i32, i32
  }
  func.func @transform_4(%arg0: i32) -> (i32, i32) {
    %c0_i32 = arith.constant 0 : i32
    %c0_i32_0 = arith.constant 0 : i32
    %c0_i32_1 = arith.constant 0 : i32
    return %c0_i32, %c0_i32_0 : i32, i32
  }
  func.func @transform_5(%arg0: i32) -> (i32, i32) {
    %c0_i32 = arith.constant 0 : i32
    %c0_i32_0 = arith.constant 0 : i32
    %c0_i32_1 = arith.constant 0 : i32
    return %c0_i32, %c0_i32_0 : i32, i32
  }
  func.func @transform_6(%arg0: i32) -> (i32, i32) {
    %c0_i32 = arith.constant 0 : i32
    %c0_i32_0 = arith.constant 0 : i32
    %c0_i32_1 = arith.constant 0 : i32
    return %c0_i32, %c0_i32_0 : i32, i32
  }
  func.func @transform_7(%arg0: i32) -> i32 {
    %c0_i32 = arith.constant 0 : i32
    %c0_i32_0 = arith.constant 0 : i32
    return %c0_i32 : i32
  }
  func.func @transform_8(%arg0: i32) -> (i32, i32) {
    %c0_i32 = arith.constant 0 : i32
    %c0_i32_0 = arith.constant 0 : i32
    return %arg0, %c0_i32 : i32, i32
  }
}

</mosaic_0001>

<llo_original>
// kernel: tpu_custom_call.1
$region0: #{tpu_custom_call.1}
  #allocation0 [shape = 'u32[]', space=smem, size = 0x4, offset = 0x4, fixed_abs, tag = 'smem constant byte address 0x4 - core index']
  #allocation1 [shape = 'u32[144,128]{1,0:T(1,128)}', space=vmem, size = 0x12000, scoped, tag = 'internal scratch']
  #allocation2 [shape = 'f32[1]{0:T(128)S(6)}', space=smem, size = 0x200, scoped, tag = 'scoped memory for tpu_custom_call.1']
  %s0 = inlined_call_operand.hbm [shape: f32[32,128], index: 0, kind: input, shape index: {}]
  %s1 = inlined_call_operand.hbm [shape: bf16[128,128], index: 1, kind: input, shape index: {}]
  %s2 = inlined_call_operand.vmem [shape: f32[1,128], index: 2, kind: input, shape index: {}]
  %s3 = inlined_call_operand.hbm [shape: bf16[128,128], index: 3, kind: input, shape index: {}]
  %s4 = inlined_call_operand.vmem [shape: f32[1,128], index: 4, kind: input, shape index: {}]
  %s5 = inlined_call_operand.hbm [shape: bf16[128,128], index: 5, kind: input, shape index: {}]
  %s6 = inlined_call_operand.vmem [shape: f32[1,128], index: 6, kind: input, shape index: {}]
  %s7 = inlined_call_operand.<no memory space> [shape: f32[1], index: 7, kind: input, shape index: {}]
  %s8 = inlined_call_operand.hbm [shape: f32[32,128], index: 8, kind: output, shape index: {}]
  %s9 = sld [smem:[#allocation0]]
  $region81: #{tpu_custom_call.1} parent=0
    _
  %s11 = ssub.s32 1, %s9
  %s12 = scalar_select 0, %s11, %s9
  %13 = sst [smem:[#allocation2]] %s7
  $region1: #{tpu_custom_call.1} parent=0
    #allocation3 [shape = 'u8[16384]{0}', space=vmem, size = 0x4000, scoped, tag = 'input window, operand 0']
    #allocation4 [shape = 's32[2]{0}', space=sflag, size = 0x8, scoped, tag = 'scoped memory for tpu_custom_call.1']
    #allocation5 [shape = 's32[2]{0}', space=sflag, size = 0x8, scoped, tag = 'scoped memory for tpu_custom_call.1']
    #allocation6 [shape = 'u8[32768]{0}', space=vmem, size = 0x8000, scoped, tag = 'input window, operand 1, single buffered']
    #allocation7 [shape = 's32[1]{0}', space=sflag, size = 0x4, scoped, tag = 'scoped memory for tpu_custom_call.1']
    #allocation8 [shape = 'u8[32768]{0}', space=vmem, size = 0x8000, scoped, tag = 'input window, operand 3, single buffered']
    #allocation9 [shape = 'u8[32768]{0}', space=vmem, size = 0x8000, scoped, tag = 'input window, operand 5, single buffered']
    #allocation10 [shape = 's32[1]{0}', space=sflag, size = 0x4, scoped, tag = 'scoped memory for tpu_custom_call.1']
    #allocation11 [shape = 'u8[16384]{0}', space=vmem, size = 0x4000, scoped, tag = 'output window, operand 0']
    %14 = vsyncpa [#allocation4], 0
    %s15 = scalar_lea.sflag [#allocation4], 1
    %16 = vsyncpa %s15, 0
    %17 = vsyncpa [#allocation7], 0
    %18 = vsyncpa [#allocation10], 0
    %19 = vsyncpa [#allocation5], 0
    %s20 = scalar_lea.sflag [#allocation5], 1
    %21 = vsyncpa %s20, 0
    loop: start=0, step=1, limit=4
    $region2: #{tpu_custom_call.1} parent=1 // loop_pre_header
      _
    $region3: #{tpu_custom_call.1} parent=1 // loop_header
      %s23 = sphi 0, %s27
      %p24 = scmp.ge.s32.totalorder %s23, 4
      %s33 = sphi 0, %s35
      %s36 = sphi 0, %s33
      %s37 = sphi 0, %s36
      %s53 = sphi 0, %s37
      %s57 = sphi 0, %s57
      %s59 = sphi 0, %s57
      %s60 = sphi 0, %s59
      %s74 = sphi 0, %s60
      %s78 = sphi 0, %s78
      %s80 = sphi 0, %s78
      %s81 = sphi 0, %s80
      %s95 = sphi 0, %s81
      %s99 = sphi 0, %s99
      %s101 = sphi 0, %s99
      %s102 = sphi 0, %s101
      %s116 = sphi 0, %s102
      %s120 = sphi 0, %s120
      %s122 = sphi 0, %s120
      %s123 = sphi 0, %s122
      %s137 = sphi 0, %s123
      %s141 = sphi 0, %s141
      %s143 = sphi 0, %s141
      %s144 = sphi 0, %s143
      %s158 = sphi 0, %s144
      %s162 = sphi 0, %s162
      %s164 = sphi 0, %s162
      %s165 = sphi 0, %s164
      %s179 = sphi 0, %s165
      %s183 = sphi 0, %s183
      %s185 = sphi 0, %s183
      %s186 = sphi 0, %s185
      %s200 = sphi 0, %s186
      %s206 = sphi 0, %s208
      %s209 = sphi 0, %s206
      %s210 = sphi 0, %s209
      %s226 = sphi 0, %s210
    $region4: #{tpu_custom_call.1} parent=1 // loop_header_branch
      %26 = sbr.rel (%p24) target = $region8
    $region5: #{tpu_custom_call.1} parent=1 // loop_body
      %s28 = ssub.s32 %s23, 1
      %s29 = ssub.s32 %s23, 2
      %s30 = sadd.s32 %s23, 1
      %s31 = ssub.s32 %s23, %s30
      %p32 = scmp.eq.s32.totalorder %s31, 0
      %s34 = sadd.s32 %s33, 1
      %s35 = scalar_select %p32, %s33, %s34
      %p38 = pneg %p32
      %p39 = scmp.eq.s32.totalorder %s23, 1
      %p40 = por %p38, %p39
      %p41 = scmp.ne.s32.totalorder %s33, %s36
      %p42 = scmp.eq.s32.totalorder %s23, 0
      %p43 = por %p41, %p42
      %p44 = scmp.ne.s32.totalorder %s33, %s36
      %p45 = scmp.eq.s32.totalorder %s28, 1
      %p46 = por %p44, %p45
      %p47 = scmp.ne.s32.totalorder %s36, %s37
      %p48 = scmp.eq.s32.totalorder %s28, 0
      %p49 = por %p47, %p48
      %p50 = scmp.ne.s32.totalorder %s36, %s37
      %p51 = scmp.eq.s32.totalorder %s29, 1
      %p52 = por %p50, %p51
      %p54 = scmp.ne.s32.totalorder %s37, %s53
      %p55 = scmp.eq.s32.totalorder %s29, 0
      %p56 = por %p54, %p55
      %s58 = sadd.s32 %s57, 1
      %p61 = scmp.eq.s32.totalorder %s23, 1
      %p62 = scmp.ne.s32.totalorder %s57, %s59
      %p63 = scmp.eq.s32.totalorder %s23, 0
      %p64 = por %p62, %p63
      %p65 = scmp.ne.s32.totalorder %s57, %s59
      %p66 = scmp.eq.s32.totalorder %s28, 1
      %p67 = por %p65, %p66
      %p68 = scmp.ne.s32.totalorder %s59, %s60
      %p69 = scmp.eq.s32.totalorder %s28, 0
      %p70 = por %p68, %p69
      %p71 = scmp.ne.s32.totalorder %s59, %s60
      %p72 = scmp.eq.s32.totalorder %s29, 1
      %p73 = por %p71, %p72
      %p75 = scmp.ne.s32.totalorder %s60, %s74
      %p76 = scmp.eq.s32.totalorder %s29, 0
      %p77 = por %p75, %p76
      %s79 = sadd.s32 %s78, 1
      %p82 = scmp.eq.s32.totalorder %s23, 1
      %p83 = scmp.ne.s32.totalorder %s78, %s80
      %p84 = scmp.eq.s32.totalorder %s23, 0
      %p85 = por %p83, %p84
      %p86 = scmp.ne.s32.totalorder %s78, %s80
      %p87 = scmp.eq.s32.totalorder %s28, 1
      %p88 = por %p86, %p87
      %p89 = scmp.ne.s32.totalorder %s80, %s81
      %p90 = scmp.eq.s32.totalorder %s28, 0
      %p91 = por %p89, %p90
      %p92 = scmp.ne.s32.totalorder %s80, %s81
      %p93 = scmp.eq.s32.totalorder %s29, 1
      %p94 = por %p92, %p93
      %p96 = scmp.ne.s32.totalorder %s81, %s95
      %p97 = scmp.eq.s32.totalorder %s29, 0
      %p98 = por %p96, %p97
      %s100 = sadd.s32 %s99, 1
      %p103 = scmp.eq.s32.totalorder %s23, 1
      %p104 = scmp.ne.s32.totalorder %s99, %s101
      %p105 = scmp.eq.s32.totalorder %s23, 0
      %p106 = por %p104, %p105
      %p107 = scmp.ne.s32.totalorder %s99, %s101
      %p108 = scmp.eq.s32.totalorder %s28, 1
      %p109 = por %p107, %p108
      %p110 = scmp.ne.s32.totalorder %s101, %s102
      %p111 = scmp.eq.s32.totalorder %s28, 0
      %p112 = por %p110, %p111
      %p113 = scmp.ne.s32.totalorder %s101, %s102
      %p114 = scmp.eq.s32.totalorder %s29, 1
      %p115 = por %p113, %p114
      %p117 = scmp.ne.s32.totalorder %s102, %s116
      %p118 = scmp.eq.s32.totalorder %s29, 0
      %p119 = por %p117, %p118
      %s121 = sadd.s32 %s120, 1
      %p124 = scmp.eq.s32.totalorder %s23, 1
      %p125 = scmp.ne.s32.totalorder %s120, %s122
      %p126 = scmp.eq.s32.totalorder %s23, 0
      %p127 = por %p125, %p126
      %p128 = scmp.ne.s32.totalorder %s120, %s122
      %p129 = scmp.eq.s32.totalorder %s28, 1
      %p130 = por %p128, %p129
      %p131 = scmp.ne.s32.totalorder %s122, %s123
      %p132 = scmp.eq.s32.totalorder %s28, 0
      %p133 = por %p131, %p132
      %p134 = scmp.ne.s32.totalorder %s122, %s123
      %p135 = scmp.eq.s32.totalorder %s29, 1
      %p136 = por %p134, %p135
      %p138 = scmp.ne.s32.totalorder %s123, %s137
      %p139 = scmp.eq.s32.totalorder %s29, 0
      %p140 = por %p138, %p139
      %s142 = sadd.s32 %s141, 1
      %p145 = scmp.eq.s32.totalorder %s23, 1
      %p146 = scmp.ne.s32.totalorder %s141, %s143
      %p147 = scmp.eq.s32.totalorder %s23, 0
      %p148 = por %p146, %p147
      %p149 = scmp.ne.s32.totalorder %s141, %s143
      %p150 = scmp.eq.s32.totalorder %s28, 1
      %p151 = por %p149, %p150
      %p152 = scmp.ne.s32.totalorder %s143, %s144
      %p153 = scmp.eq.s32.totalorder %s28, 0
      %p154 = por %p152, %p153
      %p155 = scmp.ne.s32.totalorder %s143, %s144
      %p156 = scmp.eq.s32.totalorder %s29, 1
      %p157 = por %p155, %p156
      %p159 = scmp.ne.s32.totalorder %s144, %s158
      %p160 = scmp.eq.s32.totalorder %s29, 0
      %p161 = por %p159, %p160
      %s163 = sadd.s32 %s162, 1
      %p166 = scmp.eq.s32.totalorder %s23, 1
      %p167 = scmp.ne.s32.totalorder %s162, %s164
      %p168 = scmp.eq.s32.totalorder %s23, 0
      %p169 = por %p167, %p168
      %p170 = scmp.ne.s32.totalorder %s162, %s164
      %p171 = scmp.eq.s32.totalorder %s28, 1
      %p172 = por %p170, %p171
      %p173 = scmp.ne.s32.totalorder %s164, %s165
      %p174 = scmp.eq.s32.totalorder %s28, 0
      %p175 = por %p173, %p174
      %p176 = scmp.ne.s32.totalorder %s164, %s165
      %p177 = scmp.eq.s32.totalorder %s29, 1
      %p178 = por %p176, %p177
      %p180 = scmp.ne.s32.totalorder %s165, %s179
      %p181 = scmp.eq.s32.totalorder %s29, 0
      %p182 = por %p180, %p181
      %s184 = sadd.s32 %s183, 1
      %p187 = scmp.eq.s32.totalorder %s23, 1
      %p188 = scmp.ne.s32.totalorder %s183, %s185
      %p189 = scmp.eq.s32.totalorder %s23, 0
      %p190 = por %p188, %p189
      %p191 = scmp.ne.s32.totalorder %s183, %s185
      %p192 = scmp.eq.s32.totalorder %s28, 1
      %p193 = por %p191, %p192
      %p194 = scmp.ne.s32.totalorder %s185, %s186
      %p195 = scmp.eq.s32.totalorder %s28, 0
      %p196 = por %p194, %p195
      %p197 = scmp.ne.s32.totalorder %s185, %s186
      %p198 = scmp.eq.s32.totalorder %s29, 1
      %p199 = por %p197, %p198
      %p201 = scmp.ne.s32.totalorder %s186, %s200
      %p202 = scmp.eq.s32.totalorder %s29, 0
      %p203 = por %p201, %p202
      %s204 = ssub.s32 %s23, %s30
      %p205 = scmp.eq.s32.totalorder %s204, 0
      %s207 = sadd.s32 %s206, 1
      %s208 = scalar_select %p205, %s206, %s207
      %p211 = pneg %p205
      %p212 = scmp.eq.s32.totalorder %s23, 1
      %p213 = por %p211, %p212
      %p214 = scmp.ne.s32.totalorder %s206, %s209
      %p215 = scmp.eq.s32.totalorder %s23, 0
      %p216 = por %p214, %p215
      %p217 = scmp.ne.s32.totalorder %s206, %s209
      %p218 = scmp.eq.s32.totalorder %s28, 1
      %p219 = por %p217, %p218
      %p220 = scmp.ne.s32.totalorder %s209, %s210
      %p221 = scmp.eq.s32.totalorder %s28, 0
      %p222 = por %p220, %p221
      %p223 = scmp.ne.s32.totalorder %s209, %s210
      %p224 = scmp.eq.s32.totalorder %s29, 1
      %p225 = por %p223, %p224
      %p227 = scmp.ne.s32.totalorder %s210, %s226
      %p228 = scmp.eq.s32.totalorder %s29, 0
      %p229 = por %p227, %p228
      %p230 = scmp.le.s32.totalorder 1, %s23
      %p231 = scmp.lt.s32.totalorder %s23, 3
      %p232 = pnand %p230, %p231
      %p233 = pneg %p232
      // Predicated region
      $region9: #{tpu_custom_call.1} parent=5 // pred_check
        _
      $region10: #{tpu_custom_call.1} parent=5 // pred_check_branch
        %235 = sbr.rel (%p232) target = $region12
      $region11: #{tpu_custom_call.1} parent=5 // pred_region
        %s236 = ssub.s32 %s23, 1
        // Predicated region
        $region13: #{tpu_custom_call.1} parent=11 // pred_check
          %p237 = pneg %p70
        $region14: #{tpu_custom_call.1} parent=11 // pred_check_branch
          %239 = sbr.rel (%p237) target = $region16
        $region15: #{tpu_custom_call.1} parent=11 // pred_region
          %s241 = ssub.s32 1024, 1024
          %242 = vsyncadd [#allocation7], %s241
          %s243 = sshll.u32 [#allocation6], 4
          %s244 = int_to_ptr.vmem [resolvable:$true] %s243
          %249 = dma.hbm_to_vmem [thread:$0]  %s1, 1024, %s244, [#allocation7], 64, 64, 4
        $region16: #{tpu_custom_call.1} parent=11 // pred_fallthru
          _
        // Predicated region
        $region17: #{tpu_custom_call.1} parent=11 // pred_check
          %p250 = pneg %p91
        $region18: #{tpu_custom_call.1} parent=11 // pred_check_branch
          %252 = sbr.rel (%p250) target = $region20
        $region19: #{tpu_custom_call.1} parent=11 // pred_region
          _
        $region20: #{tpu_custom_call.1} parent=11 // pred_fallthru
          _
        // Predicated region
        $region21: #{tpu_custom_call.1} parent=11 // pred_check
          %p253 = pneg %p112
        $region22: #{tpu_custom_call.1} parent=11 // pred_check_branch
          %255 = sbr.rel (%p253) target = $region24
        $region23: #{tpu_custom_call.1} parent=11 // pred_region
          %s257 = ssub.s32 1024, 1024
          %258 = vsyncadd [#allocation7], %s257
          %s259 = sshll.u32 [#allocation8], 4
          %s260 = int_to_ptr.vmem [resolvable:$true] %s259
          %265 = dma.hbm_to_vmem [thread:$0]  %s3, 1024, %s260, [#allocation7], 64, 64, 4
        $region24: #{tpu_custom_call.1} parent=11 // pred_fallthru
          _
        // Predicated region
        $region25: #{tpu_custom_call.1} parent=11 // pred_check
          %p266 = pneg %p133
        $region26: #{tpu_custom_call.1} parent=11 // pred_check_branch
          %268 = sbr.rel (%p266) target = $region28
        $region27: #{tpu_custom_call.1} parent=11 // pred_region
          _
        $region28: #{tpu_custom_call.1} parent=11 // pred_fallthru
          _
        // Predicated region
        $region29: #{tpu_custom_call.1} parent=11 // pred_check
          %p269 = pneg %p154
        $region30: #{tpu_custom_call.1} parent=11 // pred_check_branch
          %271 = sbr.rel (%p269) target = $region32
        $region31: #{tpu_custom_call.1} parent=11 // pred_region
          %s273 = ssub.s32 1024, 1024
          %274 = vsyncadd [#allocation10], %s273
          %s275 = sshll.u32 [#allocation9], 4
          %s276 = int_to_ptr.vmem [resolvable:$true] %s275
          %281 = dma.hbm_to_vmem [thread:$0]  %s5, 1024, %s276, [#allocation10], 64, 64, 4
        $region32: #{tpu_custom_call.1} parent=11 // pred_fallthru
          _
        // Predicated region
        $region33: #{tpu_custom_call.1} parent=11 // pred_check
          %p282 = pneg %p175
        $region34: #{tpu_custom_call.1} parent=11 // pred_check_branch
          %284 = sbr.rel (%p282) target = $region36
        $region35: #{tpu_custom_call.1} parent=11 // pred_region
          _
        $region36: #{tpu_custom_call.1} parent=11 // pred_fallthru
          _
        // Predicated region
        $region37: #{tpu_custom_call.1} parent=11 // pred_check
          %p285 = pneg %p196
        $region38: #{tpu_custom_call.1} parent=11 // pred_check_branch
          %287 = sbr.rel (%p285) target = $region40
        $region39: #{tpu_custom_call.1} parent=11 // pred_region
          _
        $region40: #{tpu_custom_call.1} parent=11 // pred_fallthru
          _
      $region12: #{tpu_custom_call.1} parent=5 // pred_fallthru
        _
      %p288 = scmp.lt.s32.totalorder %s23, 2
      // Predicated region
      $region41: #{tpu_custom_call.1} parent=5 // pred_check
        %p289 = pneg %p288
      $region42: #{tpu_custom_call.1} parent=5 // pred_check_branch
        %291 = sbr.rel (%p289) target = $region44
      $region43: #{tpu_custom_call.1} parent=5 // pred_region
        // Predicated region
        $region45: #{tpu_custom_call.1} parent=43 // pred_check
          %p292 = pneg %p43
        $region46: #{tpu_custom_call.1} parent=43 // pred_check_branch
          %294 = sbr.rel (%p292) target = $region48
        $region47: #{tpu_custom_call.1} parent=43 // pred_region
          %s295 = sand.u32 %s33, 1
          %s296 = scalar_lea.sflag [#allocation4], %s295
          %s297 = sand.u32 %s33, 1
          %s298 = smul.addr %s297, 16
          %s299 = scalar_lea.vmem [#allocation3], %s298
          %s300 = smul.u32 2, %s23
          %s302 = ssub.s32 256, 256
          %303 = vsyncadd %s296, %s302
          %s304 = smul.addr %s300, 128
          %s305 = scalar_lea.hbm %s0, %s304
          %s306 = sshll.u32 %s299, 4
          %s307 = int_to_ptr.vmem [resolvable:$true] %s306
          %312 = dma.hbm_to_vmem [thread:$0]  %s305, 256, %s307, %s296, 128, 128, 8
        $region48: #{tpu_custom_call.1} parent=43 // pred_fallthru
          _
      $region44: #{tpu_custom_call.1} parent=5 // pred_fallthru
        _
      %p313 = scmp.le.s32.totalorder 1, %s23
      %p314 = scmp.lt.s32.totalorder %s23, 3
      %p315 = pnand %p313, %p314
      %p316 = pneg %p315
      // Predicated region
      $region49: #{tpu_custom_call.1} parent=5 // pred_check
        _
      $region50: #{tpu_custom_call.1} parent=5 // pred_check_branch
        %318 = sbr.rel (%p315) target = $region52
      $region51: #{tpu_custom_call.1} parent=5 // pred_region
        %s319 = ssub.s32 %s23, 1
        %s320 = sand.u32 %s36, 1
        %s321 = scalar_lea.sflag [#allocation4], %s320
        %s322 = sand.u32 %s36, 1
        %s323 = smul.addr %s322, 16
        %s324 = scalar_lea.vmem [#allocation3], %s323
        // Predicated region
        $region53: #{tpu_custom_call.1} parent=51 // pred_check
          %p325 = pneg %p49
        $region54: #{tpu_custom_call.1} parent=51 // pred_check_branch
          %327 = sbr.rel (%p325) target = $region56
        $region55: #{tpu_custom_call.1} parent=51 // pred_region
          %328 = dma.done %s321, 256
        $region56: #{tpu_custom_call.1} parent=51 // pred_fallthru
          _
        // Predicated region
        $region57: #{tpu_custom_call.1} parent=51 // pred_check
          %p329 = pneg %p70
        $region58: #{tpu_custom_call.1} parent=51 // pred_check_branch
          %331 = sbr.rel (%p329) target = $region60
        $region59: #{tpu_custom_call.1} parent=51 // pred_region
          %332 = dma.done [#allocation7], 1024
        $region60: #{tpu_custom_call.1} parent=51 // pred_fallthru
          _
        // Predicated region
        $region61: #{tpu_custom_call.1} parent=51 // pred_check
          %p333 = pneg %p112
        $region62: #{tpu_custom_call.1} parent=51 // pred_check_branch
          %335 = sbr.rel (%p333) target = $region64
        $region63: #{tpu_custom_call.1} parent=51 // pred_region
          %336 = dma.done [#allocation7], 1024
        $region64: #{tpu_custom_call.1} parent=51 // pred_fallthru
          _
        // Predicated region
        $region65: #{tpu_custom_call.1} parent=51 // pred_check
          %p337 = pneg %p154
        $region66: #{tpu_custom_call.1} parent=51 // pred_check_branch
          %339 = sbr.rel (%p337) target = $region68
        $region67: #{tpu_custom_call.1} parent=51 // pred_region
          %340 = dma.done [#allocation10], 1024
        $region68: #{tpu_custom_call.1} parent=51 // pred_fallthru
          _
        %s341 = sand.u32 %s36, 1
        %s342 = scalar_lea.sflag [#allocation4], %s341
        %s343 = sand.u32 %s36, 1
        %s344 = smul.addr %s343, 16
        %s345 = scalar_lea.vmem [#allocation3], %s344
        %p346 = pneg %p49
        %p347 = pneg %p46
        %p348 = pneg %p70
        %p349 = pneg %p67
        %p350 = pneg %p91
        %p351 = pneg %p88
        %p352 = pneg %p112
        %p353 = pneg %p109
        %p354 = pneg %p133
        %p355 = pneg %p130
        %p356 = pneg %p154
        %p357 = pneg %p151
        %p358 = pneg %p175
        %p359 = pneg %p172
        %p360 = pneg %p196
        %p361 = pneg %p193
        %p362 = pneg %p222
        %p363 = pneg %p219
        %s364 = sand.u32 %s209, 1
        %s365 = scalar_lea.sflag [#allocation5], %s364
        %s366 = sand.u32 %s209, 1
        %s367 = smul.addr %s366, 16
        %s368 = scalar_lea.vmem [#allocation11], %s367
        %s369 = smul.u32 2, %s28
        %s370 = smul.u32 2, %s28
        %v372 = vld [vmem:[%s324] sm:$0xff]
        %v373 = vld [vmem:[%s324 + $0x8] sm:$0xff]
        %v374 = vpack.c.bf16 %v373, %v372
        %v375 = vld [vmem:[#allocation6] sm:$0xf]
        %v376 = vld [vmem:[#allocation6 + $0x4] sm:$0xf]
        %v377 = vld [vmem:[#allocation6 + $0x8] sm:$0xf]
        %v378 = vld [vmem:[#allocation6 + $0xc] sm:$0xf]
        %v379 = vld [vmem:[#allocation6 + $0x10] sm:$0xf]
        %v380 = vld [vmem:[#allocation6 + $0x14] sm:$0xf]
        %v381 = vld [vmem:[#allocation6 + $0x18] sm:$0xf]
        %v382 = vld [vmem:[#allocation6 + $0x1c] sm:$0xf]
        %v383 = vld [vmem:[#allocation6 + $0x20] sm:$0xf]
        %v384 = vld [vmem:[#allocation6 + $0x24] sm:$0xf]
        %v385 = vld [vmem:[#allocation6 + $0x28] sm:$0xf]
        %v386 = vld [vmem:[#allocation6 + $0x2c] sm:$0xf]
        %v387 = vld [vmem:[#allocation6 + $0x30] sm:$0xf]
        %v388 = vld [vmem:[#allocation6 + $0x34] sm:$0xf]
        %v389 = vld [vmem:[#allocation6 + $0x38] sm:$0xf]
        %v390 = vld [vmem:[#allocation6 + $0x3c] sm:$0xf]
        %v391 = vld [vmem:[%s2] sm:$0x1]
        %v393 = vlaneseq
        %v394 = vshrl.u32 %v393, 7
        %v395 = vsub.s32 0, %v394
        %v396 = vrot.slane %v391, %v395
        %v414 = vunpack.c.l.b16 %v375
        %v415 = vunpack.c.l.b16 %v376
        %v416 = vunpack.c.l.b16 %v377
        %v417 = vunpack.c.l.b16 %v378
        %v418 = vunpack.c.l.b16 %v379
        %v419 = vunpack.c.l.b16 %v380
        %v420 = vunpack.c.l.b16 %v381
        %v421 = vunpack.c.l.b16 %v382
        %v422 = vunpack.c.l.b16 %v383
        %v423 = vunpack.c.l.b16 %v384
        %v424 = vunpack.c.l.b16 %v385
        %v425 = vunpack.c.l.b16 %v386
        %v426 = vunpack.c.l.b16 %v387
        %v427 = vunpack.c.l.b16 %v388
        %v428 = vunpack.c.l.b16 %v389
        %v429 = vunpack.c.l.b16 %v390
        %v430 = vpack.c.b16 %v415, %v414
        %v431 = vpack.c.b16 %v417, %v416
        %v432 = vpack.c.b16 %v419, %v418
        %v433 = vpack.c.b16 %v421, %v420
        %v434 = vpack.c.b16 %v423, %v422
        %v435 = vpack.c.b16 %v425, %v424
        %v436 = vpack.c.b16 %v427, %v426
        %v437 = vpack.c.b16 %v429, %v428
        %446 = vmatprep.subr.bf16.mxu0 0
        %447 = vmatpush1.bf16.msra.mxu0 %v437
        %448 = vmatprep.subr.bf16.mxu0 0
        %449 = vmatpush1.bf16.msra.mxu0 %v436
        %450 = vmatprep.subr.bf16.mxu0 0
        %451 = vmatpush1.bf16.msra.mxu0 %v435
        %452 = vmatprep.subr.bf16.mxu0 0
        %453 = vmatpush1.bf16.msra.mxu0 %v434
        %454 = vmatprep.subr.bf16.mxu0 0
        %455 = vmatpush1.bf16.msra.mxu0 %v433
        %456 = vmatprep.subr.bf16.mxu0 0
        %457 = vmatpush1.bf16.msra.mxu0 %v432
        %458 = vmatprep.subr.bf16.mxu0 0
        %459 = vmatpush1.bf16.msra.mxu0 %v431
        %460 = vmatprep.subr.bf16.mxu0 0
        %461 = vmatpush1.bf16.msra.mxu0 %v430
        %462 = vmatprep.subr.bf16.mxu0 0
        %463 = vmatpush2.bf16.msra.mxu0 0
        %464 = vmatprep.subr.bf16.mxu0 0
        %465 = vmatpush2.bf16.msra.mxu0 0
        %466 = vmatprep.subr.bf16.mxu0 0
        %467 = vmatpush2.bf16.msra.mxu0 0
        %468 = vmatprep.subr.bf16.mxu0 0
        %469 = vmatpush2.bf16.msra.mxu0 0
        %470 = vmatprep.subr.bf16.mxu0 0
        %471 = vmatpush2.bf16.msra.mxu0 0
        %472 = vmatprep.subr.bf16.mxu0 0
        %473 = vmatpush2.bf16.msra.mxu0 0
        %474 = vmatprep.subr.bf16.mxu0 0
        %475 = vmatpush2.bf16.msra.mxu0 0
        %476 = vmatprep.subr.bf16.mxu0 0
        %477 = vmatpush2.bf16.msra.mxu0 0
        %478 = vmatprep.mubr.bf16.mxu0 0
        %479 = vmatmul.mubr.bf16.gmra.mxu0 %v374
        %v480 = vpop.f32.mrf.mxu0
        %v481 = vadd.f32 %v396, %v480
        %v482 = vpop.f32.mrf.mxu0
        %v483 = vpop.f32.mrf.mxu0
        %v484 = vadd.f32 %v396, %v483
        %v485 = vpop.f32.mrf.mxu0
        %486 = vdwg.mxu0
        %v487 = vmax.f32 %v481, 0.0
        %v488 = vmax.f32 %v484, 0.0
        %v489 = vpack.c.bf16 %v488, %v487
        %v490 = vld [vmem:[#allocation8] sm:$0xf]
        %v491 = vld [vmem:[#allocation8 + $0x4] sm:$0xf]
        %v492 = vld [vmem:[#allocation8 + $0x8] sm:$0xf]
        %v493 = vld [vmem:[#allocation8 + $0xc] sm:$0xf]
        %v494 = vld [vmem:[#allocation8 + $0x10] sm:$0xf]
        %v495 = vld [vmem:[#allocation8 + $0x14] sm:$0xf]
        %v496 = vld [vmem:[#allocation8 + $0x18] sm:$0xf]
        %v497 = vld [vmem:[#allocation8 + $0x1c] sm:$0xf]
        %v498 = vld [vmem:[#allocation8 + $0x20] sm:$0xf]
        %v499 = vld [vmem:[#allocation8 + $0x24] sm:$0xf]
        %v500 = vld [vmem:[#allocation8 + $0x28] sm:$0xf]
        %v501 = vld [vmem:[#allocation8 + $0x2c] sm:$0xf]
        %v502 = vld [vmem:[#allocation8 + $0x30] sm:$0xf]
        %v503 = vld [vmem:[#allocation8 + $0x34] sm:$0xf]
        %v504 = vld [vmem:[#allocation8 + $0x38] sm:$0xf]
        %v505 = vld [vmem:[#allocation8 + $0x3c] sm:$0xf]
        %v506 = vld [vmem:[%s4] sm:$0x1]
        %v508 = vlaneseq
        %v509 = vshrl.u32 %v508, 7
        %v510 = vsub.s32 0, %v509
        %v511 = vrot.slane %v506, %v510
        %v529 = vunpack.c.l.b16 %v490
        %v530 = vunpack.c.l.b16 %v491
        %v531 = vunpack.c.l.b16 %v492
        %v532 = vunpack.c.l.b16 %v493
        %v533 = vunpack.c.l.b16 %v494
        %v534 = vunpack.c.l.b16 %v495
        %v535 = vunpack.c.l.b16 %v496
        %v536 = vunpack.c.l.b16 %v497
        %v537 = vunpack.c.l.b16 %v498
        %v538 = vunpack.c.l.b16 %v499
        %v539 = vunpack.c.l.b16 %v500
        %v540 = vunpack.c.l.b16 %v501
        %v541 = vunpack.c.l.b16 %v502
        %v542 = vunpack.c.l.b16 %v503
        %v543 = vunpack.c.l.b16 %v504
        %v544 = vunpack.c.l.b16 %v505
        %v545 = vpack.c.b16 %v530, %v529
        %v546 = vpack.c.b16 %v532, %v531
        %v547 = vpack.c.b16 %v534, %v533
        %v548 = vpack.c.b16 %v536, %v535
        %v549 = vpack.c.b16 %v538, %v537
        %v550 = vpack.c.b16 %v540, %v539
        %v551 = vpack.c.b16 %v542, %v541
        %v552 = vpack.c.b16 %v544, %v543
        %561 = vmatprep.subr.bf16.mxu0 0
        %562 = vmatpush1.bf16.msra.mxu0 %v552
        %563 = vmatprep.subr.bf16.mxu0 0
        %564 = vmatpush1.bf16.msra.mxu0 %v551
        %565 = vmatprep.subr.bf16.mxu0 0
        %566 = vmatpush1.bf16.msra.mxu0 %v550
        %567 = vmatprep.subr.bf16.mxu0 0
        %568 = vmatpush1.bf16.msra.mxu0 %v549
        %569 = vmatprep.subr.bf16.mxu0 0
        %570 = vmatpush1.bf16.msra.mxu0 %v548
        %571 = vmatprep.subr.bf16.mxu0 0
        %572 = vmatpush1.bf16.msra.mxu0 %v547
        %573 = vmatprep.subr.bf16.mxu0 0
        %574 = vmatpush1.bf16.msra.mxu0 %v546
        %575 = vmatprep.subr.bf16.mxu0 0
        %576 = vmatpush1.bf16.msra.mxu0 %v545
        %577 = vmatprep.subr.bf16.mxu0 0
        %578 = vmatpush2.bf16.msra.mxu0 0
        %579 = vmatprep.subr.bf16.mxu0 0
        %580 = vmatpush2.bf16.msra.mxu0 0
        %581 = vmatprep.subr.bf16.mxu0 0
        %582 = vmatpush2.bf16.msra.mxu0 0
        %583 = vmatprep.subr.bf16.mxu0 0
        %584 = vmatpush2.bf16.msra.mxu0 0
        %585 = vmatprep.subr.bf16.mxu0 0
        %586 = vmatpush2.bf16.msra.mxu0 0
        %587 = vmatprep.subr.bf16.mxu0 0
        %588 = vmatpush2.bf16.msra.mxu0 0
        %589 = vmatprep.subr.bf16.mxu0 0
        %590 = vmatpush2.bf16.msra.mxu0 0
        %591 = vmatprep.subr.bf16.mxu0 0
        %592 = vmatpush2.bf16.msra.mxu0 0
        %593 = vmatprep.mubr.bf16.mxu0 0
        %594 = vmatmul.mubr.bf16.gmra.mxu0 %v489
        %v595 = vpop.f32.mrf.mxu0
        %v596 = vadd.f32 %v511, %v595
        %v597 = vpop.f32.mrf.mxu0
        %v598 = vpop.f32.mrf.mxu0
        %v599 = vadd.f32 %v511, %v598
        %v600 = vpop.f32.mrf.mxu0
        %601 = vdwg.mxu0
        %v602 = vmax.f32 %v596, 0.0
        %v603 = vmax.f32 %v599, 0.0
        %v604 = vpack.c.bf16 %v603, %v602
        %v605 = vld [vmem:[#allocation9] sm:$0xf]
        %v606 = vld [vmem:[#allocation9 + $0x4] sm:$0xf]
        %v607 = vld [vmem:[#allocation9 + $0x8] sm:$0xf]
        %v608 = vld [vmem:[#allocation9 + $0xc] sm:$0xf]
        %v609 = vld [vmem:[#allocation9 + $0x10] sm:$0xf]
        %v610 = vld [vmem:[#allocation9 + $0x14] sm:$0xf]
        %v611 = vld [vmem:[#allocation9 + $0x18] sm:$0xf]
        %v612 = vld [vmem:[#allocation9 + $0x1c] sm:$0xf]
        %v613 = vld [vmem:[#allocation9 + $0x20] sm:$0xf]
        %v614 = vld [vmem:[#allocation9 + $0x24] sm:$0xf]
        %v615 = vld [vmem:[#allocation9 + $0x28] sm:$0xf]
        %v616 = vld [vmem:[#allocation9 + $0x2c] sm:$0xf]
        %v617 = vld [vmem:[#allocation9 + $0x30] sm:$0xf]
        %v618 = vld [vmem:[#allocation9 + $0x34] sm:$0xf]
        %v619 = vld [vmem:[#allocation9 + $0x38] sm:$0xf]
        %v620 = vld [vmem:[#allocation9 + $0x3c] sm:$0xf]
        %v621 = vld [vmem:[%s6] sm:$0x1]
        %v623 = vlaneseq
        %v624 = vshrl.u32 %v623, 7
        %v625 = vsub.s32 0, %v624
        %v626 = vrot.slane %v621, %v625
        %v644 = vunpack.c.l.b16 %v605
        %v645 = vunpack.c.l.b16 %v606
        %v646 = vunpack.c.l.b16 %v607
        %v647 = vunpack.c.l.b16 %v608
        %v648 = vunpack.c.l.b16 %v609
        %v649 = vunpack.c.l.b16 %v610
        %v650 = vunpack.c.l.b16 %v611
        %v651 = vunpack.c.l.b16 %v612
        %v652 = vunpack.c.l.b16 %v613
        %v653 = vunpack.c.l.b16 %v614
        %v654 = vunpack.c.l.b16 %v615
        %v655 = vunpack.c.l.b16 %v616
        %v656 = vunpack.c.l.b16 %v617
        %v657 = vunpack.c.l.b16 %v618
        %v658 = vunpack.c.l.b16 %v619
        %v659 = vunpack.c.l.b16 %v620
        %v660 = vpack.c.b16 %v645, %v644
        %v661 = vpack.c.b16 %v647, %v646
        %v662 = vpack.c.b16 %v649, %v648
        %v663 = vpack.c.b16 %v651, %v650
        %v664 = vpack.c.b16 %v653, %v652
        %v665 = vpack.c.b16 %v655, %v654
        %v666 = vpack.c.b16 %v657, %v656
        %v667 = vpack.c.b16 %v659, %v658
        %676 = vmatprep.subr.bf16.mxu0 0
        %677 = vmatpush1.bf16.msra.mxu0 %v667
        %678 = vmatprep.subr.bf16.mxu0 0
        %679 = vmatpush1.bf16.msra.mxu0 %v666
        %680 = vmatprep.subr.bf16.mxu0 0
        %681 = vmatpush1.bf16.msra.mxu0 %v665
        %682 = vmatprep.subr.bf16.mxu0 0
        %683 = vmatpush1.bf16.msra.mxu0 %v664
        %684 = vmatprep.subr.bf16.mxu0 0
        %685 = vmatpush1.bf16.msra.mxu0 %v663
        %686 = vmatprep.subr.bf16.mxu0 0
        %687 = vmatpush1.bf16.msra.mxu0 %v662
        %688 = vmatprep.subr.bf16.mxu0 0
        %689 = vmatpush1.bf16.msra.mxu0 %v661
        %690 = vmatprep.subr.bf16.mxu0 0
        %691 = vmatpush1.bf16.msra.mxu0 %v660
        %692 = vmatprep.subr.bf16.mxu0 0
        %693 = vmatpush2.bf16.msra.mxu0 0
        %694 = vmatprep.subr.bf16.mxu0 0
        %695 = vmatpush2.bf16.msra.mxu0 0
        %696 = vmatprep.subr.bf16.mxu0 0
        %697 = vmatpush2.bf16.msra.mxu0 0
        %698 = vmatprep.subr.bf16.mxu0 0
        %699 = vmatpush2.bf16.msra.mxu0 0
        %700 = vmatprep.subr.bf16.mxu0 0
        %701 = vmatpush2.bf16.msra.mxu0 0
        %702 = vmatprep.subr.bf16.mxu0 0
        %703 = vmatpush2.bf16.msra.mxu0 0
        %704 = vmatprep.subr.bf16.mxu0 0
        %705 = vmatpush2.bf16.msra.mxu0 0
        %706 = vmatprep.subr.bf16.mxu0 0
        %707 = vmatpush2.bf16.msra.mxu0 0
        %708 = vmatprep.mubr.bf16.mxu0 0
        %709 = vmatmul.mubr.bf16.gmra.mxu0 %v604
        %v710 = vpop.f32.mrf.mxu0
        %v711 = vadd.f32 %v626, %v710
        %v712 = vpop.f32.mrf.mxu0
        %v713 = vpop.f32.mrf.mxu0
        %v714 = vadd.f32 %v626, %v713
        %v715 = vpop.f32.mrf.mxu0
        %716 = vdwg.mxu0
        %s717 = sld [smem:[#allocation2]]
        %v718 = vstv %s717
        %v719 = vmul.f32 %v718, %v372
        %v720 = vmul.f32 %v718, %v373
        %v721 = vadd.f32 %v711, %v719
        %v722 = vadd.f32 %v714, %v720
        %723 = vmax.xlane.f32.xlu0 %v721
        %v724 = vpop.xlane.xlu0 %723
        %725 = vmax.xlane.f32.xlu0 %v722
        %v726 = vpop.xlane.xlu0 %725
        %v727 = vsub.f32 %v721, %v724
        %v728 = vsub.f32 %v722, %v726
        %v729 = vmul.f32 %v727, 1.442695
        %v730 = vpow.pop %v729
        %v731 = vmul.f32 %v728, 1.442695
        %v732 = vpow.pop %v731
        %733 = vadd.xlane.f32.xlu0 %v730
        %v734 = vpop.xlane.xlu0 %733
        %735 = vadd.xlane.f32.xlu0 %v732
        %v736 = vpop.xlane.xlu0 %735
        %v737 = vrcp.pop %v734
        %v738 = vmul.f32 %v730, %v737
        %v739 = vrcp.pop %v736
        %v740 = vmul.f32 %v732, %v739
        %741 = vst [vmem:[%s368] sm:$0xff] %v738
        %742 = vst [vmem:[%s368 + $0x8] sm:$0xff] %v740
        %s743 = sand.u32 %s209, 1
        %s744 = scalar_lea.sflag [#allocation5], %s743
        %s745 = sand.u32 %s209, 1
        %s746 = smul.addr %s745, 16
        %s747 = scalar_lea.vmem [#allocation11], %s746
        // Predicated region
        $region69: #{tpu_custom_call.1} parent=51 // pred_check
          %p748 = pneg %p219
        $region70: #{tpu_custom_call.1} parent=51 // pred_check_branch
          %750 = sbr.rel (%p748) target = $region72
        $region71: #{tpu_custom_call.1} parent=51 // pred_region
          %s751 = smul.u32 2, %s28
          %s753 = ssub.s32 256, 256
          %754 = vsyncadd %s744, %s753
          %s755 = smul.addr %s751, 128
          %s756 = scalar_lea.hbm %s8, %s755
          %s757 = sshll.u32 %s747, 4
          %s758 = int_to_ptr.vmem [resolvable:$true] %s757
          %763 = dma.vmem_to_hbm [thread:$0]  %s758, 256, %s756, %s744, 128, 128, 8
        $region72: #{tpu_custom_call.1} parent=51 // pred_fallthru
          _
      $region52: #{tpu_custom_call.1} parent=5 // pred_fallthru
        _
      %p764 = scmp.le.s32.totalorder 2, %s23
      // Predicated region
      $region73: #{tpu_custom_call.1} parent=5 // pred_check
        %p765 = pneg %p764
      $region74: #{tpu_custom_call.1} parent=5 // pred_check_branch
        %767 = sbr.rel (%p765) target = $region76
      $region75: #{tpu_custom_call.1} parent=5 // pred_region
        %s768 = ssub.s32 %s23, 2
        // Predicated region
        $region77: #{tpu_custom_call.1} parent=75 // pred_check
          %p769 = pneg %p225
        $region78: #{tpu_custom_call.1} parent=75 // pred_check_branch
          %771 = sbr.rel (%p769) target = $region80
        $region79: #{tpu_custom_call.1} parent=75 // pred_region
          %s772 = sand.u32 %s210, 1
          %s773 = scalar_lea.sflag [#allocation5], %s772
          %s774 = sand.u32 %s210, 1
          %s775 = smul.addr %s774, 16
          %s776 = scalar_lea.vmem [#allocation11], %s775
          %777 = dma.done %s773, 256
        $region80: #{tpu_custom_call.1} parent=75 // pred_fallthru
          _
      $region76: #{tpu_custom_call.1} parent=5 // pred_fallthru
        _
    $region6: #{tpu_custom_call.1} parent=1 // loop_footer
      %s27 = sadd.s32 1, %s23
    $region7: #{tpu_custom_call.1} parent=1 // loop_footer_branch
      %22 = sbr.rel target = $region3
    $region8: #{tpu_custom_call.1} parent=1 // loop_exit
      _
    %778 = vsyncpa [#allocation4], 1
    %s779 = scalar_lea.sflag [#allocation4], 1
    %780 = vsyncpa %s779, 1
    %781 = vsyncpa [#allocation7], 1
    %782 = vsyncpa [#allocation10], 1
    %783 = vsyncpa [#allocation5], 1
    %s784 = scalar_lea.sflag [#allocation5], 1
    %785 = vsyncpa %s784, 1

</llo_original>
